<compile_context>
chip_gen: v7x
topology: tpu7x:2x2x1
jax: 0.10.0
libtpu: 0.0.40
codegen_flags: <defaults>
</compile_context>

<pallas_src>
import functools
import math

import jax
import jax.numpy as jnp
from jax.experimental import pallas as pl
from jax.experimental.pallas import tpu as pltpu


def _layernorm(h, gamma, beta, eps=1e-5):
    # h: [rows, H] f32, gamma/beta: [1, H] f32
    mu = jnp.mean(h, axis=-1, keepdims=True)
    var = jnp.mean((h - mu) ** 2, axis=-1, keepdims=True)
    return (h - mu) * jax.lax.rsqrt(var + eps) * gamma + beta


# ---------------------------------------------------------------------------
# Kernel 1: pre-norm K/V projection -> head-major bf16 K/V in HBM.
# ---------------------------------------------------------------------------
def kv_proj_kernel(x_ref, g1_ref, b1_ref, wkv_ref, bkv_ref, k_ref, v_ref, *, num_heads):
    ts, H = x_ref.shape[1], x_ref.shape[2]
    hd = H // num_heads
    bf16 = jnp.bfloat16

    h = _layernorm(x_ref[0].astype(jnp.float32), g1_ref[...], b1_ref[...])      # [ts, H] f32
    kv = jnp.dot(h.astype(bf16), wkv_ref[...],
                 preferred_element_type=jnp.float32) + bkv_ref[...]             # [ts, 2H] f32
    k = jnp.transpose(kv[:, :H].reshape(ts, num_heads, hd), (1, 0, 2))          # [nh, ts, hd]
    v = jnp.transpose(kv[:, H:].reshape(ts, num_heads, hd), (1, 0, 2))
    k_ref[0] = k.astype(bf16)
    v_ref[0] = v.astype(bf16)


# ---------------------------------------------------------------------------
# Kernel 2: per query tile — Q proj + head-batched attention + out proj + FFN.
# ---------------------------------------------------------------------------
def attn_ffn_kernel(x_ref, k_ref, v_ref,
                    g1_ref, b1_ref, g2_ref, b2_ref,
                    wq_ref, bq_ref, wo_ref, bo_ref,
                    w1_ref, bf1_ref, w2_ref, bf2_ref,
                    o_ref, *, num_heads):
    tq, H = x_ref.shape[1], x_ref.shape[2]
    nh = num_heads
    hd = H // nh
    scale = 1.0 / math.sqrt(hd)
    bf16 = jnp.bfloat16

    x_t = x_ref[0].astype(jnp.float32)                                           # [tq, H]
    h_t = _layernorm(x_t, g1_ref[...], b1_ref[...])
    # 1/sqrt(hd) folded into Q (tq*H elements) instead of the [nh,tq,S] scores.
    q_t = (jnp.dot(h_t.astype(bf16), wq_ref[...],
                   preferred_element_type=jnp.float32) + bq_ref[...]) * scale    # [tq, H] f32
    qh = jnp.transpose(q_t.reshape(tq, nh, hd), (1, 0, 2)).astype(bf16)          # [nh, tq, hd]

    # head-batched attention: no per-head loops, no scratch round-trips.
    s = jnp.einsum('hqd,hkd->hqk', qh, k_ref[0],
                   preferred_element_type=jnp.float32)                           # [nh, tq, S] f32
    s = s - jnp.max(s, axis=-1, keepdims=True)
    p = jnp.exp(s)
    p = p * pl.reciprocal(jnp.sum(p, axis=-1, keepdims=True), approx=True)
    ctx = jnp.einsum('hqk,hkd->hqd', p.astype(bf16), v_ref[0],
                     preferred_element_type=jnp.float32)                         # [nh, tq, hd] f32
    attn = jnp.transpose(ctx, (1, 0, 2)).reshape(tq, H)                          # [tq, H] f32

    attn_out = jnp.dot(attn.astype(bf16), wo_ref[...],
                       preferred_element_type=jnp.float32) + bo_ref[...]
    x1 = x_t + attn_out                                                          # residual 1

    h2 = _layernorm(x1, g2_ref[...], b2_ref[...])
    ff = jnp.dot(h2.astype(bf16), w1_ref[...],
                 preferred_element_type=jnp.float32) + bf1_ref[...]
    ff = jnp.maximum(ff, 0.0)
    ff = jnp.dot(ff.astype(bf16), w2_ref[...],
                 preferred_element_type=jnp.float32) + bf2_ref[...]
    o_ref[0] = (x1 + ff).astype(o_ref.dtype)                                     # residual 2


# ---------------------------------------------------------------------------
# Sizing helpers (generation-aware).
# ---------------------------------------------------------------------------
def _physical_vmem_bytes():
    try:
        cap = getattr(pltpu.get_tpu_info(), "vmem_capacity_bytes", None)
        if cap:
            return int(cap)
    except Exception:
        pass
    return 64 * 1024 * 1024          # conservative fallback (valid on every generation)


def _lane(n):                        # VMEM lane padding of the minor dim
    return max(int(n), 128)


def _sub(n):                         # sublane padding of the second-minor dim
    return ((int(n) + 7) // 8) * 8


def _cap_vmem(est_bytes, physical):
    limit = max(2 * int(est_bytes), 32 * 1024 * 1024)
    return int(min(limit, int(physical * 0.85)))


def _pick_seq_tile(S, target):
    """Largest divisor of S that is <= target and a multiple of 8 (else S itself)."""
    if S <= target:
        return S
    for t in range(min(target, S), 7, -1):
        if S % t == 0 and t % 8 == 0:
            return t
    return S


def _pick_tq(S, num_heads, physical_vmem):
    # Prefer full-MXU-height query tiles, constrained so the f32 score/prob
    # intermediates [nh, tq, S] (x2) stay within ~35% of physical VMEM.
    budget = int(physical_vmem * 0.35)
    for cand in (256, 128, 64, 32, 16, 8):
        if cand > S or S % cand:
            continue
        if 2 * num_heads * _sub(cand) * _lane(S) * 4 <= budget:
            return cand
    return _pick_seq_tile(S, 256)


# ---------------------------------------------------------------------------
# Wrapper.
# ---------------------------------------------------------------------------
def transformer_encoder_layer(x, params, num_heads, tq=None):
    B, S, H = x.shape
    F = params["w1"].shape[1]
    assert H % num_heads == 0
    hd = H // num_heads
    bf16 = jnp.bfloat16

    physical = _physical_vmem_bytes()
    if tq is None:
        tq = _pick_tq(S, num_heads, physical)
    assert S % tq == 0
    nqt = S // tq

    # Split the fused in-proj: K/V projected once per sequence (kernel 1), Q per
    # query tile (kernel 2). MXU operands bf16, f32 accumulation; biases/LN f32.
    wq = params["wqkv"][:, :H].astype(bf16)
    wkv = params["wqkv"][:, H:].astype(bf16)
    bq = params["bqkv"][:, :H]
    bkv = params["bqkv"][:, H:]
    wo = params["wo"].astype(bf16)
    w1 = params["w1"].astype(bf16)
    w2 = params["w2"].astype(bf16)

    def const(shape):
        # grid-invariant block: constant index map + single buffering (no wasted
        # second pipeline buffer for weights/biases).
        zeros = (0,) * len(shape)
        return pl.BlockSpec(shape, lambda *_: zeros, pipeline_mode=pl.Buffered(1))

    # ---------------- kernel 1: K/V projection ----------------
    ts = _pick_seq_tile(S, max(tq, 256))
    kv_est = (H * _lane(2 * H) * 2                                   # wkv (bf16)
              + (_lane(2 * H) + 2 * _lane(H)) * 4                    # bkv + ln1 params
              + 2 * _sub(ts) * _lane(H) * 4                          # x tile (double-buffered)
              + 2 * _sub(ts) * _lane(2 * H) * 4                      # kv / LN intermediates (f32)
              + 2 * 2 * num_heads * _sub(ts) * _lane(hd) * 2)        # k/v out blocks (dbl-buffered)
    kv_cost = pl.CostEstimate(
        flops=int(4 * B * S * H * H),
        transcendentals=int(B * S),
        bytes_accessed=int(B * S * H * 4 + 2 * H * H * 2 + 2 * B * num_heads * S * hd * 2),
    )
    k_hm, v_hm = pl.pallas_call(
        functools.partial(kv_proj_kernel, num_heads=num_heads),
        out_shape=(jax.ShapeDtypeStruct((B, num_heads, S, hd), bf16),
                   jax.ShapeDtypeStruct((B, num_heads, S, hd), bf16)),
        grid_spec=pltpu.PrefetchScalarGridSpec(
            num_scalar_prefetch=0,
            grid=(B, S // ts),
            in_specs=[
                pl.BlockSpec((1, ts, H), lambda b, st: (b, st, 0)),
                const((1, H)), const((1, H)),
                const((H, 2 * H)), const((1, 2 * H)),
            ],
            out_specs=(pl.BlockSpec((1, num_heads, ts, hd), lambda b, st: (b, 0, st, 0)),
                       pl.BlockSpec((1, num_heads, ts, hd), lambda b, st: (b, 0, st, 0))),
        ),
        compiler_params=pltpu.CompilerParams(
            dimension_semantics=("parallel", "parallel"),
            vmem_limit_bytes=_cap_vmem(kv_est, physical),
        ),
        cost_estimate=kv_cost,
    )(x, params["g1"], params["b1"], wkv, bkv)

    # ---------------- kernel 2: attention + FFN ----------------
    main_est = ((2 * H * _lane(H) + H * _lane(F) + F * _lane(H)) * 2     # wq, wo, w1, w2 (single-buffered)
                + (8 * _lane(H) + _lane(F)) * 4                          # ln params + biases
                + 2 * 2 * num_heads * _sub(S) * _lane(hd) * 2            # K/V blocks (dbl-buffered, bf16)
                + 2 * 2 * _sub(tq) * _lane(H) * 4                        # x / out tiles (dbl-buffered)
                + (2 * num_heads * _sub(tq) * _lane(S)
                   + _sub(tq) * (3 * _lane(H) + _lane(F))) * 4)          # f32 intermediates
    main_cost = pl.CostEstimate(
        flops=int(2 * B * S * (2 * H * H + 2 * H * F + 2 * S * H)),
        transcendentals=int(B * num_heads * S * S + 2 * B * S),
        bytes_accessed=int(2 * B * S * H * 4 + 2 * B * num_heads * S * hd * 2
                           + (2 * H * H + 2 * H * F) * 2),
    )

    in_specs = [
        pl.BlockSpec((1, tq, H), lambda b, qt: (b, qt, 0)),                  # x query tile
        pl.BlockSpec((1, num_heads, S, hd), lambda b, qt: (b, 0, 0, 0)),     # K (head-major, bf16)
        pl.BlockSpec((1, num_heads, S, hd), lambda b, qt: (b, 0, 0, 0)),     # V (head-major, bf16)
        const((1, H)), const((1, H)),                                        # ln1 gamma/beta
        const((1, H)), const((1, H)),                                        # ln2 gamma/beta
        const((H, H)), const((1, H)),                                        # q proj
        const((H, H)), const((1, H)),                                        # out proj
        const((H, F)), const((1, F)),                                        # ffn linear1
        const((F, H)), const((1, H)),                                        # ffn linear2
    ]
    out_spec = pl.BlockSpec((1, tq, H), lambda b, qt: (b, qt, 0))

    kernel = functools.partial(attn_ffn_kernel, num_heads=num_heads)
    return pl.pallas_call(
        kernel,
        out_shape=jax.ShapeDtypeStruct((B, S, H), x.dtype),
        grid_spec=pltpu.PrefetchScalarGridSpec(
            num_scalar_prefetch=0,
            grid=(B, nqt),
            in_specs=in_specs,
            out_specs=out_spec,
        ),
        compiler_params=pltpu.CompilerParams(
            dimension_semantics=("parallel", "parallel"),
            vmem_limit_bytes=_cap_vmem(main_est, physical),
        ),
        cost_estimate=main_cost,
    )(x, k_hm, v_hm,
      params["g1"], params["b1"], params["g2"], params["b2"],
      wq, bq, wo, params["bo"],
      w1, params["bf1"], w2, params["bf2"])


# ---------------------------------------------------------------------------
# Pure-JAX reference mirroring the kernel's numeric path (bf16 MXU operands,
# f32 accumulation / LayerNorm / softmax stats), matching nn.MultiheadAttention
# eval-mode semantics of the PyTorch module.
# ---------------------------------------------------------------------------
def ref_forward(x, p, num_heads):
    def ln(h, g, b):
        mu = h.mean(-1, keepdims=True)
        var = ((h - mu) ** 2).mean(-1, keepdims=True)
        return (h - mu) * jax.lax.rsqrt(var + 1e-5) * g + b

    bf16 = jnp.bfloat16
    B, S, H = x.shape
    hd = H // num_heads
    scale = 1.0 / float(hd) ** 0.5

    wqkv = p["wqkv"].astype(bf16)
    wo = p["wo"].astype(bf16)
    w1 = p["w1"].astype(bf16)
    w2 = p["w2"].astype(bf16)

    h = ln(x.astype(jnp.float32), p["g1"][0], p["b1"][0])
    qkv = jnp.einsum("bsh,hk->bsk", h.astype(bf16), wqkv,
                     preferred_element_type=jnp.float32) + p["bqkv"][0]
    q = (qkv[..., :H] * scale).astype(bf16).reshape(B, S, num_heads, hd).transpose(0, 2, 1, 3)
    k = qkv[..., H:2 * H].astype(bf16).reshape(B, S, num_heads, hd).transpose(0, 2, 1, 3)
    v = qkv[..., 2 * H:].astype(bf16).reshape(B, S, num_heads, hd).transpose(0, 2, 1, 3)
    s = jnp.einsum("bhqd,bhkd->bhqk", q, k, preferred_element_type=jnp.float32)
    s = s - jnp.max(s, axis=-1, keepdims=True)
    pr = jnp.exp(s)
    pr = pr / jnp.sum(pr, axis=-1, keepdims=True)
    ctx = jnp.einsum("bhqk,bhkd->bhqd", pr.astype(bf16), v,
                     preferred_element_type=jnp.float32)
    attn = ctx.transpose(0, 2, 1, 3).reshape(B, S, H)
    attn_out = jnp.einsum("bsh,hk->bsk", attn.astype(bf16), wo,
                          preferred_element_type=jnp.float32) + p["bo"][0]
    x1 = x + attn_out
    h2 = ln(x1, p["g2"][0], p["b2"][0])
    ff = jnp.einsum("bsh,hf->bsf", h2.astype(bf16), w1,
                    preferred_element_type=jnp.float32) + p["bf1"][0]
    ff = jnp.maximum(ff, 0.0)
    ff = jnp.einsum("bsf,fh->bsh", ff.astype(bf16), w2,
                    preferred_element_type=jnp.float32) + p["bf2"][0]
    return x1 + ff


if __name__ == "__main__":
    B, S, H, NH, FF = 2, 16, 32, 4, 64
    key = jax.random.PRNGKey(0)
    ks = jax.random.split(key, 12)

    x = jax.random.normal(ks[0], (B, S, H), dtype=jnp.float32)

    params = {
        "g1": jnp.ones((1, H), jnp.float32),
        "b1": jnp.zeros((1, H), jnp.float32),
        "g2": jnp.ones((1, H), jnp.float32),
        "b2": jnp.zeros((1, H), jnp.float32),
        "wqkv": jax.random.normal(ks[1], (H, 3 * H), jnp.float32) * (1.0 / H ** 0.5),
        "bqkv": jax.random.normal(ks[2], (1, 3 * H), jnp.float32) * 0.02,
        "wo": jax.random.normal(ks[3], (H, H), jnp.float32) * (1.0 / H ** 0.5),
        "bo": jax.random.normal(ks[4], (1, H), jnp.float32) * 0.02,
        "w1": jax.random.normal(ks[5], (H, FF), jnp.float32) * (1.0 / H ** 0.5),
        "bf1": jax.random.normal(ks[6], (1, FF), jnp.float32) * 0.02,
        "w2": jax.random.normal(ks[7], (FF, H), jnp.float32) * (1.0 / FF ** 0.5),
        "bf2": jax.random.normal(ks[8], (1, H), jnp.float32) * 0.02,
    }

    out = transformer_encoder_layer(x, params, num_heads=NH)
    out = jax.block_until_ready(out)

    ref = ref_forward(x, params, num_heads=NH)
    assert out.shape == (B, S, H)
    # tolerance covers the approximate-reciprocal softmax normalization and bf16
    # operand rounding (reference mirrors the bf16/f32 split, so errors are small).
    max_err = jnp.max(jnp.abs(out - ref))
    assert jnp.allclose(out, ref, atol=1e-2, rtol=1e-2), f"max err {max_err}"

    print("KERNEL_OK")
</pallas_src>

<mosaic_0001>
module attributes {stable_mosaic.version = 11 : i64} {
  func.func @kv_proj_kernel(%arg0: i32, %arg1: i32, %arg2: memref<1x16x32xf32, #tpu.memory_space<vmem>>, %arg3: memref<1x32xf32, #tpu.memory_space<vmem>>, %arg4: memref<1x32xf32, #tpu.memory_space<vmem>>, %arg5: memref<32x64xbf16, #tpu.memory_space<vmem>>, %arg6: memref<1x64xf32, #tpu.memory_space<vmem>>, %arg7: memref<1x4x16x8xbf16, #tpu.memory_space<vmem>>, %arg8: memref<1x4x16x8xbf16, #tpu.memory_space<vmem>>) attributes {dimension_semantics = [#tpu.dimension_semantics<parallel>, #tpu.dimension_semantics<parallel>], iteration_bounds = array<i64: 2, 1>, scalar_prefetch = 0 : i64, scratch_operands = 0 : i64, tpu.core_type = #tpu.core_type<tc>, window_params = [{transform_indices = @transform_0, window_bounds = array<i64: 1, 16, 32>}, {pipeline_mode = #tpu.pipeline_mode<synchronous>, transform_indices = @transform_1, window_bounds = array<i64: 1, 32>}, {pipeline_mode = #tpu.pipeline_mode<synchronous>, transform_indices = @transform_2, window_bounds = array<i64: 1, 32>}, {pipeline_mode = #tpu.pipeline_mode<synchronous>, transform_indices = @transform_3, window_bounds = array<i64: 32, 64>}, {pipeline_mode = #tpu.pipeline_mode<synchronous>, transform_indices = @transform_4, window_bounds = array<i64: 1, 64>}, {transform_indices = @transform_5, window_bounds = array<i64: 1, 4, 16, 8>}, {transform_indices = @transform_6, window_bounds = array<i64: 1, 4, 16, 8>}]} {
    %c0 = arith.constant 0 : index
    %c0_0 = arith.constant 0 : index
    %c0_1 = arith.constant 0 : index
    %0 = vector.load %arg2[%c0, %c0_0, %c0_1] : memref<1x16x32xf32, #tpu.memory_space<vmem>>, vector<1x16x32xf32>
    %1 = vector.shape_cast %0 : vector<1x16x32xf32> to vector<16x32xf32>
    %c0_2 = arith.constant 0 : index
    %c0_3 = arith.constant 0 : index
    %2 = vector.load %arg3[%c0_2, %c0_3] : memref<1x32xf32, #tpu.memory_space<vmem>>, vector<1x32xf32>
    %c0_4 = arith.constant 0 : index
    %c0_5 = arith.constant 0 : index
    %3 = vector.load %arg4[%c0_4, %c0_5] : memref<1x32xf32, #tpu.memory_space<vmem>>, vector<1x32xf32>
    %cst = arith.constant dense<0.000000e+00> : vector<16xf32>
    %4 = vector.multi_reduction <add>, %1, %cst [1] : vector<16x32xf32> to vector<16xf32>
    %5 = vector.shape_cast %4 : vector<16xf32> to vector<16x1xf32>
    %cst_6 = arith.constant 3.200000e+01 : f32
    %6 = vector.broadcast %cst_6 : f32 to vector<16x1xf32>
    %7 = arith.divf %5, %6 : vector<16x1xf32>
    %8 = vector.broadcast %7 : vector<16x1xf32> to vector<16x32xf32>
    %9 = arith.subf %1, %8 : vector<16x32xf32>
    %10 = arith.mulf %9, %9 : vector<16x32xf32>
    %cst_7 = arith.constant dense<0.000000e+00> : vector<16xf32>
    %11 = vector.multi_reduction <add>, %10, %cst_7 [1] : vector<16x32xf32> to vector<16xf32>
    %12 = vector.shape_cast %11 : vector<16xf32> to vector<16x1xf32>
    %cst_8 = arith.constant 3.200000e+01 : f32
    %13 = vector.broadcast %cst_8 : f32 to vector<16x1xf32>
    %14 = arith.divf %12, %13 : vector<16x1xf32>
    %15 = vector.broadcast %7 : vector<16x1xf32> to vector<16x32xf32>
    %16 = arith.subf %1, %15 : vector<16x32xf32>
    %cst_9 = arith.constant 9.99999974E-6 : f32
    %17 = vector.broadcast %cst_9 : f32 to vector<16x1xf32>
    %18 = arith.addf %14, %17 : vector<16x1xf32>
    %19 = math.rsqrt %18 : vector<16x1xf32>
    %20 = vector.broadcast %19 : vector<16x1xf32> to vector<16x32xf32>
    %21 = arith.mulf %16, %20 : vector<16x32xf32>
    %22 = vector.broadcast %2 : vector<1x32xf32> to vector<16x32xf32>
    %23 = arith.mulf %21, %22 : vector<16x32xf32>
    %24 = vector.broadcast %3 : vector<1x32xf32> to vector<16x32xf32>
    %25 = arith.addf %23, %24 : vector<16x32xf32>
    %26 = arith.truncf %25 : vector<16x32xf32> to vector<16x32xbf16>
    %c0_10 = arith.constant 0 : index
    %c0_11 = arith.constant 0 : index
    %27 = vector.load %arg5[%c0_10, %c0_11] : memref<32x64xbf16, #tpu.memory_space<vmem>>, vector<32x64xbf16>
    %cst_12 = arith.constant dense<0.000000e+00> : vector<16x64xf32>
    %28 = tpu.matmul %26, %27, %cst_12 {dimension_numbers = #tpu.dot_dimension_numbers<[1], [0], [0], [1], [0, 0, 1, 1], [], []>} : vector<16x32xbf16>, vector<32x64xbf16>, vector<16x64xf32> -> vector<16x64xf32>
    %c0_13 = arith.constant 0 : index
    %c0_14 = arith.constant 0 : index
    %29 = vector.load %arg6[%c0_13, %c0_14] : memref<1x64xf32, #tpu.memory_space<vmem>>, vector<1x64xf32>
    %30 = vector.broadcast %29 : vector<1x64xf32> to vector<16x64xf32>
    %31 = arith.addf %28, %30 : vector<16x64xf32>
    %32 = vector.extract_strided_slice %31 {offsets = [0, 0], sizes = [16, 32], strides = [1, 1]} : vector<16x64xf32> to vector<16x32xf32>
    %33 = vector.shape_cast %32 : vector<16x32xf32> to vector<16x4x8xf32>
    %34 = tpu.transpose %33, [1, 0, 2] : vector<16x4x8xf32> -> vector<4x16x8xf32>
    %35 = vector.extract_strided_slice %31 {offsets = [0, 32], sizes = [16, 32], strides = [1, 1]} : vector<16x64xf32> to vector<16x32xf32>
    %36 = vector.shape_cast %35 : vector<16x32xf32> to vector<16x4x8xf32>
    %37 = tpu.transpose %36, [1, 0, 2] : vector<16x4x8xf32> -> vector<4x16x8xf32>
    %38 = arith.truncf %34 : vector<4x16x8xf32> to vector<4x16x8xbf16>
    %c0_15 = arith.constant 0 : index
    %c0_16 = arith.constant 0 : index
    %c0_17 = arith.constant 0 : index
    %c0_18 = arith.constant 0 : index
    %39 = vector.load %arg7[%c0_15, %c0_16, %c0_17, %c0_18] : memref<1x4x16x8xbf16, #tpu.memory_space<vmem>>, vector<1x4x16x8xbf16>
    %40 = vector.shape_cast %39 : vector<1x4x16x8xbf16> to vector<4x16x8xbf16>
    %41 = vector.shape_cast %38 : vector<4x16x8xbf16> to vector<1x4x16x8xbf16>
    tpu.vector_store %arg7[%c0_15, %c0_16, %c0_17, %c0_18], %41 {strides = array<i32>} : memref<1x4x16x8xbf16, #tpu.memory_space<vmem>>, vector<1x4x16x8xbf16>,
    %42 = arith.truncf %37 : vector<4x16x8xf32> to vector<4x16x8xbf16>
    %c0_19 = arith.constant 0 : index
    %c0_20 = arith.constant 0 : index
    %c0_21 = arith.constant 0 : index
    %c0_22 = arith.constant 0 : index
    %43 = vector.load %arg8[%c0_19, %c0_20, %c0_21, %c0_22] : memref<1x4x16x8xbf16, #tpu.memory_space<vmem>>, vector<1x4x16x8xbf16>
    %44 = vector.shape_cast %43 : vector<1x4x16x8xbf16> to vector<4x16x8xbf16>
    %45 = vector.shape_cast %42 : vector<4x16x8xbf16> to vector<1x4x16x8xbf16>
    tpu.vector_store %arg8[%c0_19, %c0_20, %c0_21, %c0_22], %45 {strides = array<i32>} : memref<1x4x16x8xbf16, #tpu.memory_space<vmem>>, vector<1x4x16x8xbf16>,
    return
  }
  func.func @transform_0(%arg0: i32, %arg1: i32) -> (i32, i32, i32) {
    %c0_i32 = arith.constant 0 : i32
    %c0_i32_0 = arith.constant 0 : i32
    return %arg0, %arg1, %c0_i32 : i32, i32, i32
  }
  func.func @transform_1(%arg0: i32, %arg1: i32) -> (i32, i32) {
    %c0_i32 = arith.constant 0 : i32
    %c0_i32_0 = arith.constant 0 : i32
    %c0_i32_1 = arith.constant 0 : i32
    return %c0_i32, %c0_i32_0 : i32, i32
  }
  func.func @transform_2(%arg0: i32, %arg1: i32) -> (i32, i32) {
    %c0_i32 = arith.constant 0 : i32
    %c0_i32_0 = arith.constant 0 : i32
    %c0_i32_1 = arith.constant 0 : i32
    return %c0_i32, %c0_i32_0 : i32, i32
  }
  func.func @transform_3(%arg0: i32, %arg1: i32) -> (i32, i32) {
    %c0_i32 = arith.constant 0 : i32
    %c0_i32_0 = arith.constant 0 : i32
    %c0_i32_1 = arith.constant 0 : i32
    return %c0_i32, %c0_i32_0 : i32, i32
  }
  func.func @transform_4(%arg0: i32, %arg1: i32) -> (i32, i32) {
    %c0_i32 = arith.constant 0 : i32
    %c0_i32_0 = arith.constant 0 : i32
    %c0_i32_1 = arith.constant 0 : i32
    return %c0_i32, %c0_i32_0 : i32, i32
  }
  func.func @transform_5(%arg0: i32, %arg1: i32) -> (i32, i32, i32, i32) {
    %c0_i32 = arith.constant 0 : i32
    %c0_i32_0 = arith.constant 0 : i32
    %c0_i32_1 = arith.constant 0 : i32
    return %arg0, %c0_i32, %arg1, %c0_i32_0 : i32, i32, i32, i32
  }
  func.func @transform_6(%arg0: i32, %arg1: i32) -> (i32, i32, i32, i32) {
    %c0_i32 = arith.constant 0 : i32
    %c0_i32_0 = arith.constant 0 : i32
    %c0_i32_1 = arith.constant 0 : i32
    return %arg0, %c0_i32, %arg1, %c0_i32_0 : i32, i32, i32, i32
  }
}

</mosaic_0001>

<llo_original>
// kernel: tpu_custom_call.1
$region0: #{tpu_custom_call.1}
  #allocation0 [shape = 'u32[]', space=smem, size = 0x4, offset = 0x4, fixed_abs, tag = 'smem constant byte address 0x4 - core index']
  #allocation1 [shape = 'u32[144,128]{1,0:T(1,128)}', space=vmem, size = 0x12000, scoped, tag = 'internal scratch']
  %s0 = inlined_call_operand.hbm [shape: f32[2,16,32], index: 0, kind: input, shape index: {}]
  %s1 = inlined_call_operand.vmem [shape: f32[1,32], index: 1, kind: input, shape index: {}]
  %s2 = inlined_call_operand.vmem [shape: f32[1,32], index: 2, kind: input, shape index: {}]
  %s3 = inlined_call_operand.hbm [shape: bf16[32,64], index: 3, kind: input, shape index: {}]
  %s4 = inlined_call_operand.vmem [shape: f32[1,64], index: 4, kind: input, shape index: {}]
  %s5 = inlined_call_operand.vmem [shape: bf16[2,4,16,8], index: 5, kind: output, shape index: {0}]
  %s6 = inlined_call_operand.vmem [shape: bf16[2,4,16,8], index: 6, kind: output, shape index: {1}]
  %7 = xla_tuple %s5, %s6
  %s8 = sld [smem:[#allocation0]]
  $region69: #{tpu_custom_call.1} parent=0
    _
  %s10 = ssub.s32 1, %s8
  %s11 = scalar_select 0, %s10, %s8
  $region1: #{tpu_custom_call.1} parent=0
    #allocation2 [shape = 'u8[16384]{0}', space=vmem, size = 0x4000, scoped, tag = 'input window, operand 0']
    #allocation3 [shape = 's32[2]{0}', space=sflag, size = 0x8, scoped, tag = 'scoped memory for tpu_custom_call.1']
    #allocation4 [shape = 'u8[8192]{0}', space=vmem, size = 0x2000, scoped, tag = 'input window, operand 3, single buffered']
    #allocation5 [shape = 's32[1]{0}', space=sflag, size = 0x4, scoped, tag = 'scoped memory for tpu_custom_call.1']
    %12 = vsyncpa [#allocation3], 0
    %s13 = scalar_lea.sflag [#allocation3], 1
    %14 = vsyncpa %s13, 0
    %15 = vsyncpa [#allocation5], 0
    loop: start=0, step=1, limit=4
    $region2: #{tpu_custom_call.1} parent=1 // loop_pre_header
      _
    $region3: #{tpu_custom_call.1} parent=1 // loop_header
      %s17 = sphi 0, %s21
      %p18 = scmp.ge.s32.totalorder %s17, 4
      %s24 = sphi 0, %s36
      %s25 = sphi 0, %s32
      %s26 = sphi 0, %s24
      %s27 = sphi 0, %s25
      %s28 = sphi 0, %s26
      %s29 = sphi 0, %s27
      %s41 = sphi 0, %s43
      %s44 = sphi 0, %s41
      %s45 = sphi 0, %s44
      %s61 = sphi 0, %s45
      %s65 = sphi 0, %s65
      %s67 = sphi 0, %s65
      %s68 = sphi 0, %s67
      %s82 = sphi 0, %s68
      %s86 = sphi 0, %s86
      %s88 = sphi 0, %s86
      %s89 = sphi 0, %s88
      %s103 = sphi 0, %s89
      %s107 = sphi 0, %s107
      %s109 = sphi 0, %s107
      %s110 = sphi 0, %s109
      %s124 = sphi 0, %s110
      %s128 = sphi 0, %s128
      %s130 = sphi 0, %s128
      %s131 = sphi 0, %s130
      %s145 = sphi 0, %s131
      %s153 = sphi 0, %s155
      %s156 = sphi 0, %s153
      %s157 = sphi 0, %s156
      %s173 = sphi 0, %s157
      %s181 = sphi 0, %s183
      %s184 = sphi 0, %s181
      %s185 = sphi 0, %s184
      %s201 = sphi 0, %s185
    $region4: #{tpu_custom_call.1} parent=1 // loop_header_branch
      %20 = sbr.rel (%p18) target = $region8
    $region5: #{tpu_custom_call.1} parent=1 // loop_body
      %s22 = ssub.s32 %s17, 1
      %s23 = ssub.s32 %s17, 2
      %s30 = sadd.s32 1, %s25
      %p31 = scmp.ge.s32.totalorder %s30, 1
      %s32 = scalar_select %p31, 0, %s30
      %s33 = sadd.s32 1, %s24
      %s34 = scalar_select %p31, %s33, %s24
      %p35 = scmp.ge.s32.totalorder %s34, 2
      %s36 = scalar_select %p35, 0, %s34
      %s37 = ssub.s32 %s24, %s36
      %s38 = ssub.s32 %s25, %s32
      %s39 = sor.u32 %s37, %s38
      %p40 = scmp.eq.s32.totalorder %s39, 0
      %s42 = sadd.s32 %s41, 1
      %s43 = scalar_select %p40, %s41, %s42
      %p46 = pneg %p40
      %p47 = scmp.eq.s32.totalorder %s17, 1
      %p48 = por %p46, %p47
      %p49 = scmp.ne.s32.totalorder %s41, %s44
      %p50 = scmp.eq.s32.totalorder %s17, 0
      %p51 = por %p49, %p50
      %p52 = scmp.ne.s32.totalorder %s41, %s44
      %p53 = scmp.eq.s32.totalorder %s22, 1
      %p54 = por %p52, %p53
      %p55 = scmp.ne.s32.totalorder %s44, %s45
      %p56 = scmp.eq.s32.totalorder %s22, 0
      %p57 = por %p55, %p56
      %p58 = scmp.ne.s32.totalorder %s44, %s45
      %p59 = scmp.eq.s32.totalorder %s23, 1
      %p60 = por %p58, %p59
      %p62 = scmp.ne.s32.totalorder %s45, %s61
      %p63 = scmp.eq.s32.totalorder %s23, 0
      %p64 = por %p62, %p63
      %s66 = sadd.s32 %s65, 1
      %p69 = scmp.eq.s32.totalorder %s17, 1
      %p70 = scmp.ne.s32.totalorder %s65, %s67
      %p71 = scmp.eq.s32.totalorder %s17, 0
      %p72 = por %p70, %p71
      %p73 = scmp.ne.s32.totalorder %s65, %s67
      %p74 = scmp.eq.s32.totalorder %s22, 1
      %p75 = por %p73, %p74
      %p76 = scmp.ne.s32.totalorder %s67, %s68
      %p77 = scmp.eq.s32.totalorder %s22, 0
      %p78 = por %p76, %p77
      %p79 = scmp.ne.s32.totalorder %s67, %s68
      %p80 = scmp.eq.s32.totalorder %s23, 1
      %p81 = por %p79, %p80
      %p83 = scmp.ne.s32.totalorder %s68, %s82
      %p84 = scmp.eq.s32.totalorder %s23, 0
      %p85 = por %p83, %p84
      %s87 = sadd.s32 %s86, 1
      %p90 = scmp.eq.s32.totalorder %s17, 1
      %p91 = scmp.ne.s32.totalorder %s86, %s88
      %p92 = scmp.eq.s32.totalorder %s17, 0
      %p93 = por %p91, %p92
      %p94 = scmp.ne.s32.totalorder %s86, %s88
      %p95 = scmp.eq.s32.totalorder %s22, 1
      %p96 = por %p94, %p95
      %p97 = scmp.ne.s32.totalorder %s88, %s89
      %p98 = scmp.eq.s32.totalorder %s22, 0
      %p99 = por %p97, %p98
      %p100 = scmp.ne.s32.totalorder %s88, %s89
      %p101 = scmp.eq.s32.totalorder %s23, 1
      %p102 = por %p100, %p101
      %p104 = scmp.ne.s32.totalorder %s89, %s103
      %p105 = scmp.eq.s32.totalorder %s23, 0
      %p106 = por %p104, %p105
      %s108 = sadd.s32 %s107, 1
      %p111 = scmp.eq.s32.totalorder %s17, 1
      %p112 = scmp.ne.s32.totalorder %s107, %s109
      %p113 = scmp.eq.s32.totalorder %s17, 0
      %p114 = por %p112, %p113
      %p115 = scmp.ne.s32.totalorder %s107, %s109
      %p116 = scmp.eq.s32.totalorder %s22, 1
      %p117 = por %p115, %p116
      %p118 = scmp.ne.s32.totalorder %s109, %s110
      %p119 = scmp.eq.s32.totalorder %s22, 0
      %p120 = por %p118, %p119
      %p121 = scmp.ne.s32.totalorder %s109, %s110
      %p122 = scmp.eq.s32.totalorder %s23, 1
      %p123 = por %p121, %p122
      %p125 = scmp.ne.s32.totalorder %s110, %s124
      %p126 = scmp.eq.s32.totalorder %s23, 0
      %p127 = por %p125, %p126
      %s129 = sadd.s32 %s128, 1
      %p132 = scmp.eq.s32.totalorder %s17, 1
      %p133 = scmp.ne.s32.totalorder %s128, %s130
      %p134 = scmp.eq.s32.totalorder %s17, 0
      %p135 = por %p133, %p134
      %p136 = scmp.ne.s32.totalorder %s128, %s130
      %p137 = scmp.eq.s32.totalorder %s22, 1
      %p138 = por %p136, %p137
      %p139 = scmp.ne.s32.totalorder %s130, %s131
      %p140 = scmp.eq.s32.totalorder %s22, 0
      %p141 = por %p139, %p140
      %p142 = scmp.ne.s32.totalorder %s130, %s131
      %p143 = scmp.eq.s32.totalorder %s23, 1
      %p144 = por %p142, %p143
      %p146 = scmp.ne.s32.totalorder %s131, %s145
      %p147 = scmp.eq.s32.totalorder %s23, 0
      %p148 = por %p146, %p147
      %s149 = ssub.s32 %s24, %s36
      %s150 = ssub.s32 %s25, %s32
      %s151 = sor.u32 %s149, %s150
      %p152 = scmp.eq.s32.totalorder %s151, 0
      %s154 = sadd.s32 %s153, 1
      %s155 = scalar_select %p152, %s153, %s154
      %p158 = pneg %p152
      %p159 = scmp.eq.s32.totalorder %s17, 1
      %p160 = por %p158, %p159
      %p161 = scmp.ne.s32.totalorder %s153, %s156
      %p162 = scmp.eq.s32.totalorder %s17, 0
      %p163 = por %p161, %p162
      %p164 = scmp.ne.s32.totalorder %s153, %s156
      %p165 = scmp.eq.s32.totalorder %s22, 1
      %p166 = por %p164, %p165
      %p167 = scmp.ne.s32.totalorder %s156, %s157
      %p168 = scmp.eq.s32.totalorder %s22, 0
      %p169 = por %p167, %p168
      %p170 = scmp.ne.s32.totalorder %s156, %s157
      %p171 = scmp.eq.s32.totalorder %s23, 1
      %p172 = por %p170, %p171
      %p174 = scmp.ne.s32.totalorder %s157, %s173
      %p175 = scmp.eq.s32.totalorder %s23, 0
      %p176 = por %p174, %p175
      %s177 = ssub.s32 %s24, %s36
      %s178 = ssub.s32 %s25, %s32
      %s179 = sor.u32 %s177, %s178
      %p180 = scmp.eq.s32.totalorder %s179, 0
      %s182 = sadd.s32 %s181, 1
      %s183 = scalar_select %p180, %s181, %s182
      %p186 = pneg %p180
      %p187 = scmp.eq.s32.totalorder %s17, 1
      %p188 = por %p186, %p187
      %p189 = scmp.ne.s32.totalorder %s181, %s184
      %p190 = scmp.eq.s32.totalorder %s17, 0
      %p191 = por %p189, %p190
      %p192 = scmp.ne.s32.totalorder %s181, %s184
      %p193 = scmp.eq.s32.totalorder %s22, 1
      %p194 = por %p192, %p193
      %p195 = scmp.ne.s32.totalorder %s184, %s185
      %p196 = scmp.eq.s32.totalorder %s22, 0
      %p197 = por %p195, %p196
      %p198 = scmp.ne.s32.totalorder %s184, %s185
      %p199 = scmp.eq.s32.totalorder %s23, 1
      %p200 = por %p198, %p199
      %p202 = scmp.ne.s32.totalorder %s185, %s201
      %p203 = scmp.eq.s32.totalorder %s23, 0
      %p204 = por %p202, %p203
      %p205 = scmp.le.s32.totalorder 1, %s17
      %p206 = scmp.lt.s32.totalorder %s17, 3
      %p207 = pnand %p205, %p206
      %p208 = pneg %p207
      // Predicated region
      $region9: #{tpu_custom_call.1} parent=5 // pred_check
        _
      $region10: #{tpu_custom_call.1} parent=5 // pred_check_branch
        %210 = sbr.rel (%p207) target = $region12
      $region11: #{tpu_custom_call.1} parent=5 // pred_region
        %s211 = ssub.s32 %s17, 1
        // Predicated region
        $region13: #{tpu_custom_call.1} parent=11 // pred_check
          %p212 = pneg %p78
        $region14: #{tpu_custom_call.1} parent=11 // pred_check_branch
          %214 = sbr.rel (%p212) target = $region16
        $region15: #{tpu_custom_call.1} parent=11 // pred_region
          _
        $region16: #{tpu_custom_call.1} parent=11 // pred_fallthru
          _
        // Predicated region
        $region17: #{tpu_custom_call.1} parent=11 // pred_check
          %p215 = pneg %p99
        $region18: #{tpu_custom_call.1} parent=11 // pred_check_branch
          %217 = sbr.rel (%p215) target = $region20
        $region19: #{tpu_custom_call.1} parent=11 // pred_region
          _
        $region20: #{tpu_custom_call.1} parent=11 // pred_fallthru
          _
        // Predicated region
        $region21: #{tpu_custom_call.1} parent=11 // pred_check
          %p218 = pneg %p120
        $region22: #{tpu_custom_call.1} parent=11 // pred_check_branch
          %220 = sbr.rel (%p218) target = $region24
        $region23: #{tpu_custom_call.1} parent=11 // pred_region
          %s222 = ssub.s32 256, 256
          %223 = vsyncadd [#allocation5], %s222
          %s224 = sshll.u32 [#allocation4], 4
          %s225 = int_to_ptr.vmem [resolvable:$true] %s224
          %230 = dma.hbm_to_vmem [thread:$0]  %s3, 256, %s225, [#allocation5], 64, 64, 4
        $region24: #{tpu_custom_call.1} parent=11 // pred_fallthru
          _
        // Predicated region
        $region25: #{tpu_custom_call.1} parent=11 // pred_check
          %p231 = pneg %p141
        $region26: #{tpu_custom_call.1} parent=11 // pred_check_branch
          %233 = sbr.rel (%p231) target = $region28
        $region27: #{tpu_custom_call.1} parent=11 // pred_region
          _
        $region28: #{tpu_custom_call.1} parent=11 // pred_fallthru
          _
      $region12: #{tpu_custom_call.1} parent=5 // pred_fallthru
        _
      %p234 = scmp.lt.s32.totalorder %s17, 2
      // Predicated region
      $region29: #{tpu_custom_call.1} parent=5 // pred_check
        %p235 = pneg %p234
      $region30: #{tpu_custom_call.1} parent=5 // pred_check_branch
        %237 = sbr.rel (%p235) target = $region32
      $region31: #{tpu_custom_call.1} parent=5 // pred_region
        // Predicated region
        $region33: #{tpu_custom_call.1} parent=31 // pred_check
          %p238 = pneg %p51
        $region34: #{tpu_custom_call.1} parent=31 // pred_check_branch
          %240 = sbr.rel (%p238) target = $region36
        $region35: #{tpu_custom_call.1} parent=31 // pred_region
          %s241 = sand.u32 %s41, 1
          %s242 = scalar_lea.sflag [#allocation3], %s241
          %s243 = sand.u32 %s41, 1
          %s244 = smul.addr %s243, 16
          %s245 = scalar_lea.vmem [#allocation2], %s244
          %s246 = smul.u32 2, %s25
          %s248 = ssub.s32 256, 256
          %249 = vsyncadd %s242, %s248
          %s250 = smul.addr %s24, 2
          %s251 = sadd.s32 %s246, %s250
          %s252 = smul.addr %s251, 128
          %s253 = scalar_lea.hbm %s0, %s252
          %s254 = sshll.u32 %s245, 4
          %s255 = int_to_ptr.vmem [resolvable:$true] %s254
          %260 = dma.hbm_to_vmem [thread:$0]  %s253, 256, %s255, %s242, 128, 128, 8
        $region36: #{tpu_custom_call.1} parent=31 // pred_fallthru
          _
      $region32: #{tpu_custom_call.1} parent=5 // pred_fallthru
        _
      %p261 = scmp.le.s32.totalorder 1, %s17
      %p262 = scmp.lt.s32.totalorder %s17, 3
      %p263 = pnand %p261, %p262
      %p264 = pneg %p263
      // Predicated region
      $region37: #{tpu_custom_call.1} parent=5 // pred_check
        _
      $region38: #{tpu_custom_call.1} parent=5 // pred_check_branch
        %266 = sbr.rel (%p263) target = $region40
      $region39: #{tpu_custom_call.1} parent=5 // pred_region
        %s267 = ssub.s32 %s17, 1
        %s268 = sand.u32 %s44, 1
        %s269 = scalar_lea.sflag [#allocation3], %s268
        %s270 = sand.u32 %s44, 1
        %s271 = smul.addr %s270, 16
        %s272 = scalar_lea.vmem [#allocation2], %s271
        // Predicated region
        $region41: #{tpu_custom_call.1} parent=39 // pred_check
          %p273 = pneg %p57
        $region42: #{tpu_custom_call.1} parent=39 // pred_check_branch
          %275 = sbr.rel (%p273) target = $region44
        $region43: #{tpu_custom_call.1} parent=39 // pred_region
          %276 = dma.done %s269, 256
        $region44: #{tpu_custom_call.1} parent=39 // pred_fallthru
          _
        // Predicated region
        $region45: #{tpu_custom_call.1} parent=39 // pred_check
          %p277 = pneg %p120
        $region46: #{tpu_custom_call.1} parent=39 // pred_check_branch
          %279 = sbr.rel (%p277) target = $region48
        $region47: #{tpu_custom_call.1} parent=39 // pred_region
          %280 = dma.done [#allocation5], 256
        $region48: #{tpu_custom_call.1} parent=39 // pred_fallthru
          _
        %s281 = sand.u32 %s44, 1
        %s282 = scalar_lea.sflag [#allocation3], %s281
        %s283 = sand.u32 %s44, 1
        %s284 = smul.addr %s283, 16
        %s285 = scalar_lea.vmem [#allocation2], %s284
        %p286 = pneg %p57
        %p287 = pneg %p54
        %p288 = pneg %p78
        %p289 = pneg %p75
        %p290 = pneg %p99
        %p291 = pneg %p96
        %p292 = pneg %p120
        %p293 = pneg %p117
        %p294 = pneg %p141
        %p295 = pneg %p138
        %p296 = pneg %p169
        %p297 = pneg %p166
        %s298 = smul.u32 2, %s27
        %p299 = scmp.lt.s32.totalorder %s26, 1
        %s300 = scalar_select %p299, %s26, 1
        %p301 = scmp.lt.s32.totalorder %s298, 1
        %s302 = scalar_select %p301, %s298, 1
        %s303 = smul.addr %s300, 8
        %s304 = sadd.s32 %s302, %s303
        %s305 = smul.addr %s304, 4
        %s306 = scalar_lea.vmem %s5, %s305
        %p307 = pneg %p197
        %p308 = pneg %p194
        %s309 = smul.u32 2, %s27
        %p310 = scmp.lt.s32.totalorder %s26, 1
        %s311 = scalar_select %p310, %s26, 1
        %p312 = scmp.lt.s32.totalorder %s309, 1
        %s313 = scalar_select %p312, %s309, 1
        %s314 = smul.addr %s311, 8
        %s315 = sadd.s32 %s313, %s314
        %s316 = smul.addr %s315, 4
        %s317 = scalar_lea.vmem %s6, %s316
        %s318 = smul.u32 2, %s27
        %s319 = smul.u32 2, %s27
        %p320 = scmp.lt.s32.totalorder %s26, 1
        %s321 = scalar_select %p320, %s26, 1
        %p322 = scmp.lt.s32.totalorder %s319, 1
        %s323 = scalar_select %p322, %s319, 1
        %s324 = smul.addr %s321, 8
        %s325 = sadd.s32 %s323, %s324
        %s326 = smul.addr %s325, 4
        %s327 = scalar_lea.vmem %s5, %s326
        %s328 = smul.u32 2, %s27
        %s329 = smul.u32 2, %s27
        %p330 = scmp.lt.s32.totalorder %s26, 1
        %s331 = scalar_select %p330, %s26, 1
        %p332 = scmp.lt.s32.totalorder %s329, 1
        %s333 = scalar_select %p332, %s329, 1
        %s334 = smul.addr %s331, 8
        %s335 = sadd.s32 %s333, %s334
        %s336 = smul.addr %s335, 4
        %s337 = scalar_lea.vmem %s6, %s336
        %s338 = smul.u32 2, %s27
        %v340 = vld [vmem:[%s272] sm:$0xff]
        %v341 = vld [vmem:[%s272 + $0x8] sm:$0xff]
        %v342 = vld [vmem:[%s1] sm:$0x1]
        %v343 = vld [vmem:[%s2] sm:$0x1]
        %vm344 = vcmask 261120
        %v345 = vsel %vm344, %v340, 0.0
        %346 = vadd.xlane.f32.xlu0 %v345
        %v347 = vpop.xlane.xlu0 %346
        %v348 = vsel %vm344, %v341, 0.0
        %349 = vadd.xlane.f32.xlu0 %v348
        %v350 = vpop.xlane.xlu0 %349
        %v351 = vrcp.pop 32.0
        %v352 = vmul.f32 %v347, %v351
        %v353 = vmul.f32 %v350, %v351
        %v354 = vsub.f32 %v340, %v352
        %v355 = vsub.f32 %v341, %v353
        %v356 = vmul.f32 %v354, %v354
        %v357 = vmul.f32 %v355, %v355
        %v358 = vsel %vm344, %v356, 0.0
        %359 = vadd.xlane.f32.xlu0 %v358
        %v360 = vpop.xlane.xlu0 %359
        %v361 = vsel %vm344, %v357, 0.0
        %362 = vadd.xlane.f32.xlu0 %v361
        %v363 = vpop.xlane.xlu0 %362
        %v364 = vmul.f32 %v360, %v351
        %v365 = vmul.f32 %v363, %v351
        %v366 = vadd.f32 %v364, 1e-05
        %v367 = vadd.f32 %v365, 1e-05
        %v368 = vrsqrt.pop %v366
        %v369 = vrsqrt.pop %v367
        %v370 = vmul.f32 %v354, %v368
        %v371 = vmul.f32 %v355, %v369
        %v373 = vlaneseq
        %v374 = vshrl.u32 %v373, 7
        %v375 = vsub.s32 0, %v374
        %v376 = vrot.slane %v342, %v375
        %v378 = vmul.f32 %v370, %v376
        %v379 = vmul.f32 %v371, %v376
        %v381 = vlaneseq
        %v382 = vshrl.u32 %v381, 7
        %v383 = vsub.s32 0, %v382
        %v384 = vrot.slane %v343, %v383
        %v386 = vadd.f32 %v378, %v384
        %v387 = vadd.f32 %v379, %v384
        %v388 = vpack.c.bf16 %v387, %v386
        %v389 = vld [vmem:[#allocation4] sm:$0xf]
        %v390 = vld [vmem:[#allocation4 + $0x4] sm:$0xf]
        %v391 = vld [vmem:[#allocation4 + $0x8] sm:$0xf]
        %v392 = vld [vmem:[#allocation4 + $0xc] sm:$0xf]
        %v393 = vld [vmem:[%s4] sm:$0x1]
        %v395 = vlaneseq
        %v396 = vshrl.u32 %v395, 7
        %v397 = vsub.s32 0, %v396
        %v398 = vrot.slane %v393, %v397
        %v404 = vunpack.c.l.b16 %v389
        %v405 = vunpack.c.l.b16 %v390
        %v406 = vunpack.c.l.b16 %v391
        %v407 = vunpack.c.l.b16 %v392
        %v408 = vpack.c.b16 %v405, %v404
        %v409 = vpack.c.b16 %v407, %v406
        %v413 = vsel %vm344, %v388, 0
        %415 = vmatprep.subr.bf16.mxu0 0
        %416 = vmatpush1.bf16.msra.mxu0 %v408
        %417 = vmatprep.subr.bf16.mxu0 0
        %418 = vmatpush1.bf16.msra.mxu0 %v409
        %419 = vmatprep.subr.bf16.mxu0 0
        %420 = vmatpush1.bf16.msra.mxu0 0
        %421 = vmatprep.subr.bf16.mxu0 0
        %422 = vmatpush1.bf16.msra.mxu0 0
        %423 = vmatprep.subr.bf16.mxu0 0
        %424 = vmatpush1.bf16.msra.mxu0 0
        %425 = vmatprep.subr.bf16.mxu0 0
        %426 = vmatpush1.bf16.msra.mxu0 0
        %427 = vmatprep.subr.bf16.mxu0 0
        %428 = vmatpush1.bf16.msra.mxu0 0
        %429 = vmatprep.subr.bf16.mxu0 0
        %430 = vmatpush1.bf16.msra.mxu0 0
        %431 = vmatprep.subr.bf16.mxu0 0
        %432 = vmatpush1.bf16.msra.mxu0 0
        %433 = vmatprep.subr.bf16.mxu0 0
        %434 = vmatpush1.bf16.msra.mxu0 0
        %435 = vmatprep.subr.bf16.mxu0 0
        %436 = vmatpush1.bf16.msra.mxu0 0
        %437 = vmatprep.subr.bf16.mxu0 0
        %438 = vmatpush1.bf16.msra.mxu0 0
        %439 = vmatprep.subr.bf16.mxu0 0
        %440 = vmatpush1.bf16.msra.mxu0 0
        %441 = vmatprep.subr.bf16.mxu0 0
        %442 = vmatpush1.bf16.msra.mxu0 0
        %443 = vmatprep.subr.bf16.mxu0 0
        %444 = vmatpush1.bf16.msra.mxu0 0
        %445 = vmatprep.subr.bf16.mxu0 0
        %446 = vmatpush1.bf16.msra.mxu0 0
        %447 = vmatprep.mubr.bf16.mxu0 0
        %448 = vmatmul.mubr.bf16.gmra.mrb[0].mxu0 %v413
        %v449 = vpop.f32.mrb[0].mxu0
        %v450 = vadd.f32 %v398, %v449
        %v451 = vpop.f32.mrb[0].mxu0
        %v452 = vpop.f32.mrb[0].mxu0
        %v453 = vadd.f32 %v398, %v452
        %v454 = vpop.f32.mrb[0].mxu0
        %455 = vdwg.mxu0
        %458 = vrot.lane.b32.xlu0 %v450, 120
        %v459 = vpop.permute.xlu0 %458
        %460 = vrot.lane.b32.xlu0 %v453, 120
        %v461 = vpop.permute.xlu0 %460
        %464 = vrot.lane.b32.xlu0 %v450, 112
        %v465 = vpop.permute.xlu0 %464
        %466 = vrot.lane.b32.xlu0 %v453, 112
        %v467 = vpop.permute.xlu0 %466
        %470 = vrot.lane.b32.xlu0 %v450, 104
        %v471 = vpop.permute.xlu0 %470
        %472 = vrot.lane.b32.xlu0 %v453, 104
        %v473 = vpop.permute.xlu0 %472
        %v476 = vcombine.low %v450, %v465
        %v477 = vcombine.high %v450, %v465
        %v479 = vunpack.c.l.s4 1983009808
        %v480 = vunpack.c.0.s8 %v479
        %v481 = vlaneseq
        %v482 = vshrl.u32 %v481, 7
        %v483 = vsub.s32 %v480, %v482
        %v484 = vrot.slane %v476, %v483
        %v486 = vunpack.c.l.s4 1983009808
        %v487 = vunpack.c.0.s8 %v486
        %v488 = vlaneseq
        %v489 = vshrl.u32 %v488, 7
        %v490 = vsub.s32 %v487, %v489
        %v491 = vrot.slane %v477, %v490
        %v492 = vcombine.low %v459, %v471
        %v493 = vcombine.high %v459, %v471
        %v495 = vunpack.c.l.s4 1983009808
        %v496 = vunpack.c.0.s8 %v495
        %v497 = vlaneseq
        %v498 = vshrl.u32 %v497, 7
        %v499 = vsub.s32 %v496, %v498
        %v500 = vrot.slane %v492, %v499
        %v502 = vunpack.c.l.s4 1983009808
        %v503 = vunpack.c.0.s8 %v502
        %v504 = vlaneseq
        %v505 = vshrl.u32 %v504, 7
        %v506 = vsub.s32 %v503, %v505
        %v507 = vrot.slane %v493, %v506
        %v508 = vcombine.low %v484, %v500
        %v509 = vcombine.high %v484, %v500
        %v511 = vunpack.c.l.s4 1934713408
        %v512 = vunpack.c.0.s8 %v511
        %v513 = vlaneseq
        %v514 = vshrl.u32 %v513, 7
        %v515 = vsub.s32 %v512, %v514
        %v516 = vrot.slane %v508, %v515
        %v518 = vunpack.c.l.s4 1934713408
        %v519 = vunpack.c.0.s8 %v518
        %v520 = vlaneseq
        %v521 = vshrl.u32 %v520, 7
        %v522 = vsub.s32 %v519, %v521
        %v523 = vrot.slane %v509, %v522
        %v524 = vcombine.low %v491, %v507
        %v525 = vcombine.high %v491, %v507
        %v527 = vunpack.c.l.s4 1934713408
        %v528 = vunpack.c.0.s8 %v527
        %v529 = vlaneseq
        %v530 = vshrl.u32 %v529, 7
        %v531 = vsub.s32 %v528, %v530
        %v532 = vrot.slane %v524, %v531
        %v534 = vunpack.c.l.s4 1934713408
        %v535 = vunpack.c.0.s8 %v534
        %v536 = vlaneseq
        %v537 = vshrl.u32 %v536, 7
        %v538 = vsub.s32 %v535, %v537
        %v539 = vrot.slane %v525, %v538
        %v540 = vcombine.high %v516, 0.0
        %v541 = vcombine.high %v523, 0.0
        %v542 = vcombine.high %v532, 0.0
        %v543 = vcombine.high %v539, 0.0
        %v544 = vcombine.low %v453, %v467
        %v545 = vcombine.high %v453, %v467
        %v547 = vunpack.c.l.s4 1983009808
        %v548 = vunpack.c.0.s8 %v547
        %v549 = vlaneseq
        %v550 = vshrl.u32 %v549, 7
        %v551 = vsub.s32 %v548, %v550
        %v552 = vrot.slane %v544, %v551
        %v554 = vunpack.c.l.s4 1983009808
        %v555 = vunpack.c.0.s8 %v554
        %v556 = vlaneseq
        %v557 = vshrl.u32 %v556, 7
        %v558 = vsub.s32 %v555, %v557
        %v559 = vrot.slane %v545, %v558
        %v560 = vcombine.low %v461, %v473
        %v561 = vcombine.high %v461, %v473
        %v563 = vunpack.c.l.s4 1983009808
        %v564 = vunpack.c.0.s8 %v563
        %v565 = vlaneseq
        %v566 = vshrl.u32 %v565, 7
        %v567 = vsub.s32 %v564, %v566
        %v568 = vrot.slane %v560, %v567
        %v570 = vunpack.c.l.s4 1983009808
        %v571 = vunpack.c.0.s8 %v570
        %v572 = vlaneseq
        %v573 = vshrl.u32 %v572, 7
        %v574 = vsub.s32 %v571, %v573
        %v575 = vrot.slane %v561, %v574
        %v576 = vcombine.low %v552, %v568
        %v577 = vcombine.high %v552, %v568
        %v579 = vunpack.c.l.s4 1934713408
        %v580 = vunpack.c.0.s8 %v579
        %v581 = vlaneseq
        %v582 = vshrl.u32 %v581, 7
        %v583 = vsub.s32 %v580, %v582
        %v584 = vrot.slane %v576, %v583
        %v586 = vunpack.c.l.s4 1934713408
        %v587 = vunpack.c.0.s8 %v586
        %v588 = vlaneseq
        %v589 = vshrl.u32 %v588, 7
        %v590 = vsub.s32 %v587, %v589
        %v591 = vrot.slane %v577, %v590
        %v592 = vcombine.low %v559, %v575
        %v593 = vcombine.high %v559, %v575
        %v595 = vunpack.c.l.s4 1934713408
        %v596 = vunpack.c.0.s8 %v595
        %v597 = vlaneseq
        %v598 = vshrl.u32 %v597, 7
        %v599 = vsub.s32 %v596, %v598
        %v600 = vrot.slane %v592, %v599
        %v602 = vunpack.c.l.s4 1934713408
        %v603 = vunpack.c.0.s8 %v602
        %v604 = vlaneseq
        %v605 = vshrl.u32 %v604, 7
        %v606 = vsub.s32 %v603, %v605
        %v607 = vrot.slane %v593, %v606
        %v608 = vcombine.high %v584, 0.0
        %v609 = vcombine.high %v591, 0.0
        %v610 = vcombine.high %v600, 0.0
        %v611 = vcombine.high %v607, 0.0
        %v612 = vcombine.low %v516, %v523
        %v614 = vunpack.c.l.s4 1983009808
        %v615 = vunpack.c.0.s8 %v614
        %v616 = vlaneseq
        %v617 = vshrl.u32 %v616, 7
        %v618 = vsub.s32 %v615, %v617
        %v619 = vrot.slane %v612, %v618
        %v620 = vcombine.low %v540, %v541
        %v622 = vunpack.c.l.s4 1983009808
        %v623 = vunpack.c.0.s8 %v622
        %v624 = vlaneseq
        %v625 = vshrl.u32 %v624, 7
        %v626 = vsub.s32 %v623, %v625
        %v627 = vrot.slane %v620, %v626
        %v628 = vcombine.low %v532, %v539
        %v630 = vunpack.c.l.s4 1983009808
        %v631 = vunpack.c.0.s8 %v630
        %v632 = vlaneseq
        %v633 = vshrl.u32 %v632, 7
        %v634 = vsub.s32 %v631, %v633
        %v635 = vrot.slane %v628, %v634
        %v636 = vcombine.low %v542, %v543
        %v638 = vunpack.c.l.s4 1983009808
        %v639 = vunpack.c.0.s8 %v638
        %v640 = vlaneseq
        %v641 = vshrl.u32 %v640, 7
        %v642 = vsub.s32 %v639, %v641
        %v643 = vrot.slane %v636, %v642
        %v644 = vcombine.low %v619, %v627
        %v645 = vcombine.high %v619, %v627
        %v647 = vunpack.c.l.s4 1934713408
        %v648 = vunpack.c.0.s8 %v647
        %v649 = vlaneseq
        %v650 = vshrl.u32 %v649, 7
        %v651 = vsub.s32 %v648, %v650
        %v652 = vrot.slane %v644, %v651
        %v654 = vunpack.c.l.s4 1934713408
        %v655 = vunpack.c.0.s8 %v654
        %v656 = vlaneseq
        %v657 = vshrl.u32 %v656, 7
        %v658 = vsub.s32 %v655, %v657
        %v659 = vrot.slane %v645, %v658
        %v660 = vcombine.low %v635, %v643
        %v661 = vcombine.high %v635, %v643
        %v663 = vunpack.c.l.s4 1934713408
        %v664 = vunpack.c.0.s8 %v663
        %v665 = vlaneseq
        %v666 = vshrl.u32 %v665, 7
        %v667 = vsub.s32 %v664, %v666
        %v668 = vrot.slane %v660, %v667
        %v670 = vunpack.c.l.s4 1934713408
        %v671 = vunpack.c.0.s8 %v670
        %v672 = vlaneseq
        %v673 = vshrl.u32 %v672, 7
        %v674 = vsub.s32 %v671, %v673
        %v675 = vrot.slane %v661, %v674
        %v676 = vcombine.low %v652, %v668
        %v677 = vcombine.high %v652, %v668
        %v678 = vcombine.low %v659, %v675
        %v679 = vcombine.high %v659, %v675
        %v680 = vcombine.low %v584, %v591
        %v682 = vunpack.c.l.s4 1983009808
        %v683 = vunpack.c.0.s8 %v682
        %v684 = vlaneseq
        %v685 = vshrl.u32 %v684, 7
        %v686 = vsub.s32 %v683, %v685
        %v687 = vrot.slane %v680, %v686
        %v688 = vcombine.low %v608, %v609
        %v690 = vunpack.c.l.s4 1983009808
        %v691 = vunpack.c.0.s8 %v690
        %v692 = vlaneseq
        %v693 = vshrl.u32 %v692, 7
        %v694 = vsub.s32 %v691, %v693
        %v695 = vrot.slane %v688, %v694
        %v696 = vcombine.low %v600, %v607
        %v698 = vunpack.c.l.s4 1983009808
        %v699 = vunpack.c.0.s8 %v698
        %v700 = vlaneseq
        %v701 = vshrl.u32 %v700, 7
        %v702 = vsub.s32 %v699, %v701
        %v703 = vrot.slane %v696, %v702
        %v704 = vcombine.low %v610, %v611
        %v706 = vunpack.c.l.s4 1983009808
        %v707 = vunpack.c.0.s8 %v706
        %v708 = vlaneseq
        %v709 = vshrl.u32 %v708, 7
        %v710 = vsub.s32 %v707, %v709
        %v711 = vrot.slane %v704, %v710
        %v712 = vcombine.low %v687, %v695
        %v713 = vcombine.high %v687, %v695
        %v715 = vunpack.c.l.s4 1934713408
        %v716 = vunpack.c.0.s8 %v715
        %v717 = vlaneseq
        %v718 = vshrl.u32 %v717, 7
        %v719 = vsub.s32 %v716, %v718
        %v720 = vrot.slane %v712, %v719
        %v722 = vunpack.c.l.s4 1934713408
        %v723 = vunpack.c.0.s8 %v722
        %v724 = vlaneseq
        %v725 = vshrl.u32 %v724, 7
        %v726 = vsub.s32 %v723, %v725
        %v727 = vrot.slane %v713, %v726
        %v728 = vcombine.low %v703, %v711
        %v729 = vcombine.high %v703, %v711
        %v731 = vunpack.c.l.s4 1934713408
        %v732 = vunpack.c.0.s8 %v731
        %v733 = vlaneseq
        %v734 = vshrl.u32 %v733, 7
        %v735 = vsub.s32 %v732, %v734
        %v736 = vrot.slane %v728, %v735
        %v738 = vunpack.c.l.s4 1934713408
        %v739 = vunpack.c.0.s8 %v738
        %v740 = vlaneseq
        %v741 = vshrl.u32 %v740, 7
        %v742 = vsub.s32 %v739, %v741
        %v743 = vrot.slane %v729, %v742
        %v744 = vcombine.low %v720, %v736
        %v745 = vcombine.high %v720, %v736
        %v746 = vcombine.low %v727, %v743
        %v747 = vcombine.high %v727, %v743
        %748 = vrot.lane.b32.xlu0 %v450, 96
        %v749 = vpop.permute.xlu0 %748
        %750 = vrot.lane.b32.xlu0 %v453, 96
        %v751 = vpop.permute.xlu0 %750
        %752 = vrot.lane.b32.xlu0 %v459, 96
        %v753 = vpop.permute.xlu0 %752
        %754 = vrot.lane.b32.xlu0 %v461, 96
        %v755 = vpop.permute.xlu0 %754
        %756 = vrot.lane.b32.xlu0 %v465, 96
        %v757 = vpop.permute.xlu0 %756
        %758 = vrot.lane.b32.xlu0 %v467, 96
        %v759 = vpop.permute.xlu0 %758
        %760 = vrot.lane.b32.xlu0 %v471, 96
        %v761 = vpop.permute.xlu0 %760
        %762 = vrot.lane.b32.xlu0 %v473, 96
        %v763 = vpop.permute.xlu0 %762
        %v772 = vcombine.low %v749, %v757
        %v773 = vcombine.high %v749, %v757
        %v775 = vunpack.c.l.s4 1983009808
        %v776 = vunpack.c.0.s8 %v775
        %v777 = vlaneseq
        %v778 = vshrl.u32 %v777, 7
        %v779 = vsub.s32 %v776, %v778
        %v780 = vrot.slane %v772, %v779
        %v782 = vunpack.c.l.s4 1983009808
        %v783 = vunpack.c.0.s8 %v782
        %v784 = vlaneseq
        %v785 = vshrl.u32 %v784, 7
        %v786 = vsub.s32 %v783, %v785
        %v787 = vrot.slane %v773, %v786
        %v788 = vcombine.low %v753, %v761
        %v789 = vcombine.high %v753, %v761
        %v791 = vunpack.c.l.s4 1983009808
        %v792 = vunpack.c.0.s8 %v791
        %v793 = vlaneseq
        %v794 = vshrl.u32 %v793, 7
        %v795 = vsub.s32 %v792, %v794
        %v796 = vrot.slane %v788, %v795
        %v798 = vunpack.c.l.s4 1983009808
        %v799 = vunpack.c.0.s8 %v798
        %v800 = vlaneseq
        %v801 = vshrl.u32 %v800, 7
        %v802 = vsub.s32 %v799, %v801
        %v803 = vrot.slane %v789, %v802
        %v804 = vcombine.low %v780, %v796
        %v805 = vcombine.high %v780, %v796
        %v807 = vunpack.c.l.s4 1934713408
        %v808 = vunpack.c.0.s8 %v807
        %v809 = vlaneseq
        %v810 = vshrl.u32 %v809, 7
        %v811 = vsub.s32 %v808, %v810
        %v812 = vrot.slane %v804, %v811
        %v814 = vunpack.c.l.s4 1934713408
        %v815 = vunpack.c.0.s8 %v814
        %v816 = vlaneseq
        %v817 = vshrl.u32 %v816, 7
        %v818 = vsub.s32 %v815, %v817
        %v819 = vrot.slane %v805, %v818
        %v820 = vcombine.low %v787, %v803
        %v821 = vcombine.high %v787, %v803
        %v823 = vunpack.c.l.s4 1934713408
        %v824 = vunpack.c.0.s8 %v823
        %v825 = vlaneseq
        %v826 = vshrl.u32 %v825, 7
        %v827 = vsub.s32 %v824, %v826
        %v828 = vrot.slane %v820, %v827
        %v830 = vunpack.c.l.s4 1934713408
        %v831 = vunpack.c.0.s8 %v830
        %v832 = vlaneseq
        %v833 = vshrl.u32 %v832, 7
        %v834 = vsub.s32 %v831, %v833
        %v835 = vrot.slane %v821, %v834
        %v836 = vcombine.high %v812, 0.0
        %v837 = vcombine.high %v819, 0.0
        %v838 = vcombine.high %v828, 0.0
        %v839 = vcombine.high %v835, 0.0
        %v840 = vcombine.low %v751, %v759
        %v841 = vcombine.high %v751, %v759
        %v843 = vunpack.c.l.s4 1983009808
        %v844 = vunpack.c.0.s8 %v843
        %v845 = vlaneseq
        %v846 = vshrl.u32 %v845, 7
        %v847 = vsub.s32 %v844, %v846
        %v848 = vrot.slane %v840, %v847
        %v850 = vunpack.c.l.s4 1983009808
        %v851 = vunpack.c.0.s8 %v850
        %v852 = vlaneseq
        %v853 = vshrl.u32 %v852, 7
        %v854 = vsub.s32 %v851, %v853
        %v855 = vrot.slane %v841, %v854
        %v856 = vcombine.low %v755, %v763
        %v857 = vcombine.high %v755, %v763
        %v859 = vunpack.c.l.s4 1983009808
        %v860 = vunpack.c.0.s8 %v859
        %v861 = vlaneseq
        %v862 = vshrl.u32 %v861, 7
        %v863 = vsub.s32 %v860, %v862
        %v864 = vrot.slane %v856, %v863
        %v866 = vunpack.c.l.s4 1983009808
        %v867 = vunpack.c.0.s8 %v866
        %v868 = vlaneseq
        %v869 = vshrl.u32 %v868, 7
        %v870 = vsub.s32 %v867, %v869
        %v871 = vrot.slane %v857, %v870
        %v872 = vcombine.low %v848, %v864
        %v873 = vcombine.high %v848, %v864
        %v875 = vunpack.c.l.s4 1934713408
        %v876 = vunpack.c.0.s8 %v875
        %v877 = vlaneseq
        %v878 = vshrl.u32 %v877, 7
        %v879 = vsub.s32 %v876, %v878
        %v880 = vrot.slane %v872, %v879
        %v882 = vunpack.c.l.s4 1934713408
        %v883 = vunpack.c.0.s8 %v882
        %v884 = vlaneseq
        %v885 = vshrl.u32 %v884, 7
        %v886 = vsub.s32 %v883, %v885
        %v887 = vrot.slane %v873, %v886
        %v888 = vcombine.low %v855, %v871
        %v889 = vcombine.high %v855, %v871
        %v891 = vunpack.c.l.s4 1934713408
        %v892 = vunpack.c.0.s8 %v891
        %v893 = vlaneseq
        %v894 = vshrl.u32 %v893, 7
        %v895 = vsub.s32 %v892, %v894
        %v896 = vrot.slane %v888, %v895
        %v898 = vunpack.c.l.s4 1934713408
        %v899 = vunpack.c.0.s8 %v898
        %v900 = vlaneseq
        %v901 = vshrl.u32 %v900, 7
        %v902 = vsub.s32 %v899, %v901
        %v903 = vrot.slane %v889, %v902
        %v904 = vcombine.high %v880, 0.0
        %v905 = vcombine.high %v887, 0.0
        %v906 = vcombine.high %v896, 0.0
        %v907 = vcombine.high %v903, 0.0
        %v908 = vcombine.low %v812, %v819
        %v910 = vunpack.c.l.s4 1983009808
        %v911 = vunpack.c.0.s8 %v910
        %v912 = vlaneseq
        %v913 = vshrl.u32 %v912, 7
        %v914 = vsub.s32 %v911, %v913
        %v915 = vrot.slane %v908, %v914
        %v916 = vcombine.low %v836, %v837
        %v918 = vunpack.c.l.s4 1983009808
        %v919 = vunpack.c.0.s8 %v918
        %v920 = vlaneseq
        %v921 = vshrl.u32 %v920, 7
        %v922 = vsub.s32 %v919, %v921
        %v923 = vrot.slane %v916, %v922
        %v924 = vcombine.low %v828, %v835
        %v926 = vunpack.c.l.s4 1983009808
        %v927 = vunpack.c.0.s8 %v926
        %v928 = vlaneseq
        %v929 = vshrl.u32 %v928, 7
        %v930 = vsub.s32 %v927, %v929
        %v931 = vrot.slane %v924, %v930
        %v932 = vcombine.low %v838, %v839
        %v934 = vunpack.c.l.s4 1983009808
        %v935 = vunpack.c.0.s8 %v934
        %v936 = vlaneseq
        %v937 = vshrl.u32 %v936, 7
        %v938 = vsub.s32 %v935, %v937
        %v939 = vrot.slane %v932, %v938
        %v940 = vcombine.low %v915, %v923
        %v941 = vcombine.high %v915, %v923
        %v943 = vunpack.c.l.s4 1934713408
        %v944 = vunpack.c.0.s8 %v943
        %v945 = vlaneseq
        %v946 = vshrl.u32 %v945, 7
        %v947 = vsub.s32 %v944, %v946
        %v948 = vrot.slane %v940, %v947
        %v950 = vunpack.c.l.s4 1934713408
        %v951 = vunpack.c.0.s8 %v950
        %v952 = vlaneseq
        %v953 = vshrl.u32 %v952, 7
        %v954 = vsub.s32 %v951, %v953
        %v955 = vrot.slane %v941, %v954
        %v956 = vcombine.low %v931, %v939
        %v957 = vcombine.high %v931, %v939
        %v959 = vunpack.c.l.s4 1934713408
        %v960 = vunpack.c.0.s8 %v959
        %v961 = vlaneseq
        %v962 = vshrl.u32 %v961, 7
        %v963 = vsub.s32 %v960, %v962
        %v964 = vrot.slane %v956, %v963
        %v966 = vunpack.c.l.s4 1934713408
        %v967 = vunpack.c.0.s8 %v966
        %v968 = vlaneseq
        %v969 = vshrl.u32 %v968, 7
        %v970 = vsub.s32 %v967, %v969
        %v971 = vrot.slane %v957, %v970
        %v972 = vcombine.low %v948, %v964
        %v973 = vcombine.high %v948, %v964
        %v974 = vcombine.low %v955, %v971
        %v975 = vcombine.high %v955, %v971
        %v976 = vcombine.low %v880, %v887
        %v978 = vunpack.c.l.s4 1983009808
        %v979 = vunpack.c.0.s8 %v978
        %v980 = vlaneseq
        %v981 = vshrl.u32 %v980, 7
        %v982 = vsub.s32 %v979, %v981
        %v983 = vrot.slane %v976, %v982
        %v984 = vcombine.low %v904, %v905
        %v986 = vunpack.c.l.s4 1983009808
        %v987 = vunpack.c.0.s8 %v986
        %v988 = vlaneseq
        %v989 = vshrl.u32 %v988, 7
        %v990 = vsub.s32 %v987, %v989
        %v991 = vrot.slane %v984, %v990
        %v992 = vcombine.low %v896, %v903
        %v994 = vunpack.c.l.s4 1983009808
        %v995 = vunpack.c.0.s8 %v994
        %v996 = vlaneseq
        %v997 = vshrl.u32 %v996, 7
        %v998 = vsub.s32 %v995, %v997
        %v999 = vrot.slane %v992, %v998
        %v1000 = vcombine.low %v906, %v907
        %v1002 = vunpack.c.l.s4 1983009808
        %v1003 = vunpack.c.0.s8 %v1002
        %v1004 = vlaneseq
        %v1005 = vshrl.u32 %v1004, 7
        %v1006 = vsub.s32 %v1003, %v1005
        %v1007 = vrot.slane %v1000, %v1006
        %v1008 = vcombine.low %v983, %v991
        %v1009 = vcombine.high %v983, %v991
        %v1011 = vunpack.c.l.s4 1934713408
        %v1012 = vunpack.c.0.s8 %v1011
        %v1013 = vlaneseq
        %v1014 = vshrl.u32 %v1013, 7
        %v1015 = vsub.s32 %v1012, %v1014
        %v1016 = vrot.slane %v1008, %v1015
        %v1018 = vunpack.c.l.s4 1934713408
        %v1019 = vunpack.c.0.s8 %v1018
        %v1020 = vlaneseq
        %v1021 = vshrl.u32 %v1020, 7
        %v1022 = vsub.s32 %v1019, %v1021
        %v1023 = vrot.slane %v1009, %v1022
        %v1024 = vcombine.low %v999, %v1007
        %v1025 = vcombine.high %v999, %v1007
        %v1027 = vunpack.c.l.s4 1934713408
        %v1028 = vunpack.c.0.s8 %v1027
        %v1029 = vlaneseq
        %v1030 = vshrl.u32 %v1029, 7
        %v1031 = vsub.s32 %v1028, %v1030
        %v1032 = vrot.slane %v1024, %v1031
        %v1034 = vunpack.c.l.s4 1934713408
        %v1035 = vunpack.c.0.s8 %v1034
        %v1036 = vlaneseq
        %v1037 = vshrl.u32 %v1036, 7
        %v1038 = vsub.s32 %v1035, %v1037
        %v1039 = vrot.slane %v1025, %v1038
        %v1040 = vcombine.low %v1016, %v1032
        %v1041 = vcombine.high %v1016, %v1032
        %v1042 = vcombine.low %v1023, %v1039
        %v1043 = vcombine.high %v1023, %v1039
        %v1044 = vpack.c.bf16 %v744, %v676
        %v1045 = vpack.c.bf16 %v745, %v677
        %v1046 = vpack.c.bf16 %v746, %v678
        %v1047 = vpack.c.bf16 %v747, %v679
        %v1052 = vunpack.c.l.b16 %v1044
        %v1053 = vunpack.c.h.b16 %v1044
        %v1054 = vunpack.c.l.b16 %v1045
        %v1055 = vunpack.c.h.b16 %v1045
        %v1056 = vunpack.c.l.b16 %v1046
        %v1057 = vunpack.c.h.b16 %v1046
        %v1058 = vunpack.c.l.b16 %v1047
        %v1059 = vunpack.c.h.b16 %v1047
        %v1060 = vpack.c.b16 %v1052, %v1052
        %v1061 = vpack.c.b16 %v1053, %v1053
        %v1062 = vpack.c.b16 %v1054, %v1054
        %v1063 = vpack.c.b16 %v1055, %v1055
        %v1064 = vpack.c.b16 %v1056, %v1056
        %v1065 = vpack.c.b16 %v1057, %v1057
        %v1066 = vpack.c.b16 %v1058, %v1058
        %v1067 = vpack.c.b16 %v1059, %v1059
        %vm1076 = vcmask 60416
        %1077 = vst.msk [vmem:[%s327] sm:$0xf] %vm1076, %v1060
        %1078 = vst.msk [vmem:[%s327 + $0x4] sm:$0xf] %vm1076, %v1061
        %1079 = vst.msk [vmem:[%s327 + $0x8] sm:$0xf] %vm1076, %v1062
        %1080 = vst.msk [vmem:[%s327 + $0xc] sm:$0xf] %vm1076, %v1063
        %1081 = vst.msk [vmem:[%s327 + $0x10] sm:$0xf] %vm1076, %v1064
        %1082 = vst.msk [vmem:[%s327 + $0x14] sm:$0xf] %vm1076, %v1065
        %1083 = vst.msk [vmem:[%s327 + $0x18] sm:$0xf] %vm1076, %v1066
        %1084 = vst.msk [vmem:[%s327 + $0x1c] sm:$0xf] %vm1076, %v1067
        %v1085 = vpack.c.bf16 %v1040, %v972
        %v1086 = vpack.c.bf16 %v1041, %v973
        %v1087 = vpack.c.bf16 %v1042, %v974
        %v1088 = vpack.c.bf16 %v1043, %v975
        %v1093 = vunpack.c.l.b16 %v1085
        %v1094 = vunpack.c.h.b16 %v1085
        %v1095 = vunpack.c.l.b16 %v1086
        %v1096 = vunpack.c.h.b16 %v1086
        %v1097 = vunpack.c.l.b16 %v1087
        %v1098 = vunpack.c.h.b16 %v1087
        %v1099 = vunpack.c.l.b16 %v1088
        %v1100 = vunpack.c.h.b16 %v1088
        %v1101 = vpack.c.b16 %v1093, %v1093
        %v1102 = vpack.c.b16 %v1094, %v1094
        %v1103 = vpack.c.b16 %v1095, %v1095
        %v1104 = vpack.c.b16 %v1096, %v1096
        %v1105 = vpack.c.b16 %v1097, %v1097
        %v1106 = vpack.c.b16 %v1098, %v1098
        %v1107 = vpack.c.b16 %v1099, %v1099
        %v1108 = vpack.c.b16 %v1100, %v1100
        %1117 = vst.msk [vmem:[%s337] sm:$0xf] %vm1076, %v1101
        %1118 = vst.msk [vmem:[%s337 + $0x4] sm:$0xf] %vm1076, %v1102
        %1119 = vst.msk [vmem:[%s337 + $0x8] sm:$0xf] %vm1076, %v1103
        %1120 = vst.msk [vmem:[%s337 + $0xc] sm:$0xf] %vm1076, %v1104
        %1121 = vst.msk [vmem:[%s337 + $0x10] sm:$0xf] %vm1076, %v1105
        %1122 = vst.msk [vmem:[%s337 + $0x14] sm:$0xf] %vm1076, %v1106
        %1123 = vst.msk [vmem:[%s337 + $0x18] sm:$0xf] %vm1076, %v1107
        %1124 = vst.msk [vmem:[%s337 + $0x1c] sm:$0xf] %vm1076, %v1108
        %s1125 = smul.u32 2, %s27
        %p1126 = scmp.lt.s32.totalorder %s26, 1
        %s1127 = scalar_select %p1126, %s26, 1
        %p1128 = scmp.lt.s32.totalorder %s1125, 1
        %s1129 = scalar_select %p1128, %s1125, 1
        %s1130 = smul.addr %s1127, 8
        %s1131 = sadd.s32 %s1129, %s1130
        %s1132 = smul.addr %s1131, 4
        %s1133 = scalar_lea.vmem %s5, %s1132
        %s1134 = smul.u32 2, %s27
        %p1135 = scmp.lt.s32.totalorder %s26, 1
        %s1136 = scalar_select %p1135, %s26, 1
        %p1137 = scmp.lt.s32.totalorder %s1134, 1
        %s1138 = scalar_select %p1137, %s1134, 1
        %s1139 = smul.addr %s1136, 8
        %s1140 = sadd.s32 %s1138, %s1139
        %s1141 = smul.addr %s1140, 4
        %s1142 = scalar_lea.vmem %s6, %s1141
        // Predicated region
        $region49: #{tpu_custom_call.1} parent=39 // pred_check
          %p1143 = pneg %p166
        $region50: #{tpu_custom_call.1} parent=39 // pred_check_branch
          %1145 = sbr.rel (%p1143) target = $region52
        $region51: #{tpu_custom_call.1} parent=39 // pred_region
          %s1146 = smul.u32 2, %s27
        $region52: #{tpu_custom_call.1} parent=39 // pred_fallthru
          _
        // Predicated region
        $region53: #{tpu_custom_call.1} parent=39 // pred_check
          %p1147 = pneg %p194
        $region54: #{tpu_custom_call.1} parent=39 // pred_check_branch
          %1149 = sbr.rel (%p1147) target = $region56
        $region55: #{tpu_custom_call.1} parent=39 // pred_region
          %s1150 = smul.u32 2, %s27
        $region56: #{tpu_custom_call.1} parent=39 // pred_fallthru
          _
      $region40: #{tpu_custom_call.1} parent=5 // pred_fallthru
        _
      %p1151 = scmp.le.s32.totalorder 2, %s17
      // Predicated region
      $region57: #{tpu_custom_call.1} parent=5 // pred_check
        %p1152 = pneg %p1151
      $region58: #{tpu_custom_call.1} parent=5 // pred_check_branch
        %1154 = sbr.rel (%p1152) target = $region60
      $region59: #{tpu_custom_call.1} parent=5 // pred_region
        %s1155 = ssub.s32 %s17, 2
        // Predicated region
        $region61: #{tpu_custom_call.1} parent=59 // pred_check
          %p1156 = pneg %p172
        $region62: #{tpu_custom_call.1} parent=59 // pred_check_branch
          %1158 = sbr.rel (%p1156) target = $region64
        $region63: #{tpu_custom_call.1} parent=59 // pred_region
          %s1159 = smul.u32 2, %s29
          %p1160 = scmp.lt.s32.totalorder %s28, 1
          %s1161 = scalar_select %p1160, %s28, 1
          %p1162 = scmp.lt.s32.totalorder %s1159, 1
          %s1163 = scalar_select %p1162, %s1159, 1
          %s1164 = smul.addr %s1161, 8
          %s1165 = sadd.s32 %s1163, %s1164
          %s1166 = smul.addr %s1165, 4
          %s1167 = scalar_lea.vmem %s5, %s1166
        $region64: #{tpu_custom_call.1} parent=59 // pred_fallthru
          _
        // Predicated region
        $region65: #{tpu_custom_call.1} parent=59 // pred_check
          %p1168 = pneg %p200
        $region66: #{tpu_custom_call.1} parent=59 // pred_check_branch
          %1170 = sbr.rel (%p1168) target = $region68
        $region67: #{tpu_custom_call.1} parent=59 // pred_region
          %s1171 = smul.u32 2, %s29
          %p1172 = scmp.lt.s32.totalorder %s28, 1
          %s1173 = scalar_select %p1172, %s28, 1
          %p1174 = scmp.lt.s32.totalorder %s1171, 1
          %s1175 = scalar_select %p1174, %s1171, 1
          %s1176 = smul.addr %s1173, 8
          %s1177 = sadd.s32 %s1175, %s1176
          %s1178 = smul.addr %s1177, 4
          %s1179 = scalar_lea.vmem %s6, %s1178
        $region68: #{tpu_custom_call.1} parent=59 // pred_fallthru
          _
      $region60: #{tpu_custom_call.1} parent=5 // pred_fallthru
        _
    $region6: #{tpu_custom_call.1} parent=1 // loop_footer
      %s21 = sadd.s32 1, %s17
    $region7: #{tpu_custom_call.1} parent=1 // loop_footer_branch
      %16 = sbr.rel target = $region3
    $region8: #{tpu_custom_call.1} parent=1 // loop_exit
      _
    %1180 = vsyncpa [#allocation3], 1
    %s1181 = scalar_lea.sflag [#allocation3], 1
    %1182 = vsyncpa %s1181, 1
    %1183 = vsyncpa [#allocation5], 1

</llo_original>
